<compile_context>
chip_gen: v7x
topology: tpu7x:2x2x1
jax: 0.10.0
libtpu: 0.0.40
codegen_flags: <defaults>
</compile_context>

<pallas_src>
import jax
import jax.numpy as jnp
from jax.experimental import pallas as pl
from jax.experimental.pallas import tpu as pltpu

_LANES = 128


def _make_kernel(rows_x, rows_l, tile_r, c_total, need_mask):
    """Per-tile kernel (closure over static shapes).

    Tile shapes: x (rows_x, tile_r, 128), label (rows_l, tile_r, 128).
    Writes a single f32 partial sum broadcast over a lane-dense (1, 1, 128) block.
    """
    inv_cnt = 1.0 / float(rows_x + rows_l)

    def kernel(x_ref, l_ref, out_ref):
        x = x_ref[...].astype(jnp.float32)      # (rows_x, tile_r, 128)
        b = l_ref[...].astype(jnp.float32)      # (rows_l, tile_r, 128)

        # Numerically stable softplus: log(1+exp(x)) = max(x,0) + log1p(exp(-|x|))
        a = jnp.maximum(x, 0.0) + jnp.log1p(jnp.exp(-jnp.abs(x)))

        col_a = jnp.sum(a, axis=0)               # (tile_r, 128)  sum over batch
        col_b = jnp.sum(b, axis=0)               # (tile_r, 128)
        m = (col_a + col_b) * inv_cnt            # per-column shift (conditioning)

        ad = a - m[None, :, :]                   # (rows_x, tile_r, 128)
        bd = b - m[None, :, :]                   # (rows_l, tile_r, 128)
        sa = jnp.sum(ad, axis=0)                 # (tile_r, 128)
        sb = jnp.sum(bd, axis=0)

        # Per-sublane-row partial sums (lets us mask ragged rows cheaply).
        row_a2 = jnp.sum(jnp.sum(ad * ad, axis=0), axis=-1, keepdims=True)  # (tile_r,1)
        row_b2 = jnp.sum(jnp.sum(bd * bd, axis=0), axis=-1, keepdims=True)  # (tile_r,1)
        row_cr = jnp.sum(sa * sb, axis=-1, keepdims=True)                   # (tile_r,1)

        if need_mask:  # static: emitted only when the last row-tile is ragged;
            # cost is O(tile_r), not O(elements) -> off the hot path.
            i = pl.program_id(0)
            row = jax.lax.broadcasted_iota(jnp.int32, (tile_r, 1), 0) + i * tile_r
            valid = row < c_total
            row_a2 = jnp.where(valid, row_a2, 0.0)
            row_b2 = jnp.where(valid, row_b2, 0.0)
            row_cr = jnp.where(valid, row_cr, 0.0)

        partial = (float(rows_l) * jnp.sum(row_a2)
                   + float(rows_x) * jnp.sum(row_b2)
                   - 2.0 * jnp.sum(row_cr))      # f32 scalar

        # Lane-dense (unmasked) store of the per-block partial sum.
        out_ref[...] = jnp.broadcast_to(partial, out_ref.shape)

    return kernel


def mse_semseg_loss_pallas(x, y, *, tile_r=None, target_tile_bytes=4 * 1024 * 1024):
    """x: (B, 1, H, W); y: {'label': (B, H, W)} -> {'mse_loss': f32 scalar}.

    If `tile_r` is given it must be a multiple of 8 (or >= HW/128).
    """
    label = y["label"]
    assert x.ndim == 4 and x.shape[1] == 1, "expected x of shape (B, 1, H, W)"
    assert label.ndim == 3, "expected label of shape (B, H, W)"
    Bx = x.shape[0]
    HW = x.shape[2] * x.shape[3]
    Bl = label.shape[0]
    assert label.shape[1] * label.shape[2] == HW, "spatial sizes must match"

    x2 = x.reshape(Bx, HW)                       # channel dim is 1 -> squeeze
    l2 = label.reshape(Bl, HW)

    # Pad the pixel axis to a multiple of 128 (lane width).  Pad values contribute
    # exactly 0 to the loss: softplus(-1e4) == 0 and label pad == 0.
    C = pl.cdiv(HW, _LANES)                      # number of 128-wide pixel columns
    pad = C * _LANES - HW
    if pad:
        x2 = jnp.pad(x2, ((0, 0), (0, pad)), constant_values=-1e4)
        l2 = jnp.pad(l2, ((0, 0), (0, pad)), constant_values=0)
    x3 = x2.reshape(Bx, C, _LANES)               # contiguous reshape: free
    l3 = l2.reshape(Bl, C, _LANES)

    if tile_r is None:
        # Size from the actual itemsizes (bf16-aware), ~target_tile_bytes of
        # combined input bytes per grid step; keep tile_r a multiple of 8.
        per_col_bytes = (Bx * x.dtype.itemsize + Bl * label.dtype.itemsize) * _LANES
        budget_r = max(8, (target_tile_bytes // per_col_bytes) // 8 * 8)
        # Cap so the grid has >= 2 steps whenever there is enough data
        # (lets the "parallel" grid shard across v7x's two TensorCores).
        cap_r = max(8, ((pl.cdiv(C, 2) + 7) // 8) * 8)
        tile_r = min(budget_r, cap_r)
    if tile_r >= C:
        tile_r = C                               # single full-extent block

    num_blocks = pl.cdiv(C, tile_r)
    need_mask = (C % tile_r) != 0                # ragged last row-tile only

    kernel = _make_kernel(Bx, Bl, tile_r, C, need_mask)

    elems_x = Bx * C * _LANES
    elems_l = Bl * C * _LANES
    cost = pl.CostEstimate(
        flops=int(8 * elems_x + 5 * elems_l + 6 * C * _LANES),
        transcendentals=int(2 * elems_x),        # exp + log1p per x element
        bytes_accessed=int(elems_x * x.dtype.itemsize
                           + elems_l * label.dtype.itemsize
                           + num_blocks * _LANES * 4),
    )

    partials = pl.pallas_call(
        kernel,
        out_shape=jax.ShapeDtypeStruct((num_blocks, 1, _LANES), jnp.float32),
        grid_spec=pltpu.PrefetchScalarGridSpec(
            num_scalar_prefetch=0,
            grid=(num_blocks,),
            in_specs=[
                pl.BlockSpec((Bx, tile_r, _LANES), lambda i: (0, i, 0)),
                pl.BlockSpec((Bl, tile_r, _LANES), lambda i: (0, i, 0)),
            ],
            out_specs=pl.BlockSpec((1, 1, _LANES), lambda i: (i, 0, 0)),
        ),
        compiler_params=pltpu.CompilerParams(
            dimension_semantics=("parallel",),
            vmem_limit_bytes=48 * 1024 * 1024,
        ),
        cost_estimate=cost,
    )(x3, l3)

    total = jnp.sum(partials[:, 0, 0])
    loss = total / jnp.float32(Bx * Bl * HW)     # mean over broadcast (Bx, Bl, HW)
    return {"mse_loss": loss}


def mse_semseg_loss_ref(x, y):
    """Pure-JAX reference: F.mse_loss(softplus(x.flatten(2,3)), label.flatten(1,2)),
    including PyTorch's (B,1,HW) vs (B,HW) -> (B,B,HW) broadcast."""
    label = y["label"]
    B = x.shape[0]
    a = jax.nn.softplus(x.reshape(B, 1, -1).astype(jnp.float32))   # (B, 1, HW)
    b = label.reshape(label.shape[0], -1).astype(jnp.float32)      # (B, HW)
    diff = a - b                                                   # -> (B, B, HW)
    return {"mse_loss": jnp.mean(diff * diff)}


if __name__ == "__main__":
    key = jax.random.PRNGKey(0)
    k0, k1, k2, k3, k4, k5 = jax.random.split(key, 6)

    # Shapes consistent with the module: x is (B, 1, H, W), label is (B, H, W).
    B, H, W = 2, 16, 16
    x = jax.random.normal(k0, (B, 1, H, W), dtype=jnp.float32).astype(jnp.bfloat16)
    label = jax.random.uniform(k1, (B, H, W), dtype=jnp.float32).astype(jnp.bfloat16)
    y = {"label": label}

    out = mse_semseg_loss_pallas(x, y)
    loss = jax.block_until_ready(out["mse_loss"])
    ref = mse_semseg_loss_ref(x, y)["mse_loss"]
    assert jnp.allclose(loss, ref, rtol=5e-4, atol=1e-6), (loss, ref)

    # Multi-block + ragged last row-tile (C=18, tile_r=8 -> 3 blocks, masked tail).
    H2, W2 = 48, 48
    x2 = jax.random.normal(k2, (B, 1, H2, W2), dtype=jnp.float32).astype(jnp.bfloat16)
    label2 = jax.random.uniform(k3, (B, H2, W2), dtype=jnp.float32).astype(jnp.bfloat16)
    y2 = {"label": label2}
    out2 = mse_semseg_loss_pallas(x2, y2, tile_r=8)
    loss2 = jax.block_until_ready(out2["mse_loss"])
    ref2 = mse_semseg_loss_ref(x2, y2)["mse_loss"]
    assert jnp.allclose(loss2, ref2, rtol=5e-4, atol=1e-6), (loss2, ref2)

    # HW not a multiple of 128 -> zero-contribution lane-padding path (192 -> 256).
    H3, W3 = 16, 12
    x3 = jax.random.normal(k4, (B, 1, H3, W3), dtype=jnp.float32).astype(jnp.bfloat16)
    label3 = jax.random.uniform(k5, (B, H3, W3), dtype=jnp.float32).astype(jnp.bfloat16)
    y3 = {"label": label3}
    out3 = mse_semseg_loss_pallas(x3, y3)
    loss3 = jax.block_until_ready(out3["mse_loss"])
    ref3 = mse_semseg_loss_ref(x3, y3)["mse_loss"]
    assert jnp.allclose(loss3, ref3, rtol=5e-4, atol=1e-6), (loss3, ref3)

    print("KERNEL_OK")
</pallas_src>

<mosaic_0001>
module attributes {stable_mosaic.version = 11 : i64} {
  func.func @kernel(%arg0: i32, %arg1: memref<2x2x128xbf16, #tpu.memory_space<vmem>>, %arg2: memref<2x2x128xbf16, #tpu.memory_space<vmem>>, %arg3: memref<1x1x128xf32, #tpu.memory_space<vmem>>) attributes {dimension_semantics = [#tpu.dimension_semantics<parallel>], iteration_bounds = array<i64: 1>, scalar_prefetch = 0 : i64, scratch_operands = 0 : i64, tpu.core_type = #tpu.core_type<tc>, window_params = [{transform_indices = @transform_0, window_bounds = array<i64: 2, 2, 128>}, {transform_indices = @transform_1, window_bounds = array<i64: 2, 2, 128>}, {transform_indices = @transform_2, window_bounds = array<i64: 1, 1, 128>}]} {
    %c0 = arith.constant 0 : index
    %c0_0 = arith.constant 0 : index
    %c0_1 = arith.constant 0 : index
    %0 = vector.load %arg1[%c0, %c0_0, %c0_1] : memref<2x2x128xbf16, #tpu.memory_space<vmem>>, vector<2x2x128xbf16>
    %1 = arith.extf %0 : vector<2x2x128xbf16> to vector<2x2x128xf32>
    %c0_2 = arith.constant 0 : index
    %c0_3 = arith.constant 0 : index
    %c0_4 = arith.constant 0 : index
    %2 = vector.load %arg2[%c0_2, %c0_3, %c0_4] : memref<2x2x128xbf16, #tpu.memory_space<vmem>>, vector<2x2x128xbf16>
    %3 = arith.extf %2 : vector<2x2x128xbf16> to vector<2x2x128xf32>
    %cst = arith.constant 0.000000e+00 : f32
    %4 = vector.broadcast %cst : f32 to vector<2x2x128xf32>
    %5 = arith.maximumf %1, %4 : vector<2x2x128xf32>
    %6 = math.absf %1 : vector<2x2x128xf32>
    %cst_5 = arith.constant 0.000000e+00 : f32
    %7 = vector.broadcast %cst_5 : f32 to vector<2x2x128xf32>
    %8 = arith.subf %7, %6 : vector<2x2x128xf32>
    %9 = math.exp %8 : vector<2x2x128xf32>
    %10 = math.log1p %9 : vector<2x2x128xf32>
    %11 = arith.addf %5, %10 : vector<2x2x128xf32>
    %cst_6 = arith.constant dense<0.000000e+00> : vector<2x128xf32>
    %12 = vector.multi_reduction <add>, %11, %cst_6 [0] : vector<2x2x128xf32> to vector<2x128xf32>
    %cst_7 = arith.constant dense<0.000000e+00> : vector<2x128xf32>
    %13 = vector.multi_reduction <add>, %3, %cst_7 [0] : vector<2x2x128xf32> to vector<2x128xf32>
    %14 = arith.addf %12, %13 : vector<2x128xf32>
    %cst_8 = arith.constant 2.500000e-01 : f32
    %15 = vector.broadcast %cst_8 : f32 to vector<2x128xf32>
    %16 = arith.mulf %14, %15 : vector<2x128xf32>
    %17 = vector.shape_cast %16 : vector<2x128xf32> to vector<1x2x128xf32>
    %18 = vector.broadcast %17 : vector<1x2x128xf32> to vector<2x2x128xf32>
    %19 = arith.subf %11, %18 : vector<2x2x128xf32>
    %20 = vector.shape_cast %16 : vector<2x128xf32> to vector<1x2x128xf32>
    %21 = vector.broadcast %20 : vector<1x2x128xf32> to vector<2x2x128xf32>
    %22 = arith.subf %3, %21 : vector<2x2x128xf32>
    %cst_9 = arith.constant dense<0.000000e+00> : vector<2x128xf32>
    %23 = vector.multi_reduction <add>, %19, %cst_9 [0] : vector<2x2x128xf32> to vector<2x128xf32>
    %cst_10 = arith.constant dense<0.000000e+00> : vector<2x128xf32>
    %24 = vector.multi_reduction <add>, %22, %cst_10 [0] : vector<2x2x128xf32> to vector<2x128xf32>
    %25 = arith.mulf %19, %19 : vector<2x2x128xf32>
    %cst_11 = arith.constant dense<0.000000e+00> : vector<2x128xf32>
    %26 = vector.multi_reduction <add>, %25, %cst_11 [0] : vector<2x2x128xf32> to vector<2x128xf32>
    %cst_12 = arith.constant dense<0.000000e+00> : vector<2xf32>
    %27 = vector.multi_reduction <add>, %26, %cst_12 [1] : vector<2x128xf32> to vector<2xf32>
    %28 = vector.shape_cast %27 : vector<2xf32> to vector<2x1xf32>
    %29 = arith.mulf %22, %22 : vector<2x2x128xf32>
    %cst_13 = arith.constant dense<0.000000e+00> : vector<2x128xf32>
    %30 = vector.multi_reduction <add>, %29, %cst_13 [0] : vector<2x2x128xf32> to vector<2x128xf32>
    %cst_14 = arith.constant dense<0.000000e+00> : vector<2xf32>
    %31 = vector.multi_reduction <add>, %30, %cst_14 [1] : vector<2x128xf32> to vector<2xf32>
    %32 = vector.shape_cast %31 : vector<2xf32> to vector<2x1xf32>
    %33 = arith.mulf %23, %24 : vector<2x128xf32>
    %cst_15 = arith.constant dense<0.000000e+00> : vector<2xf32>
    %34 = vector.multi_reduction <add>, %33, %cst_15 [1] : vector<2x128xf32> to vector<2xf32>
    %35 = vector.shape_cast %34 : vector<2xf32> to vector<2x1xf32>
    %36 = vector.shape_cast %28 : vector<2x1xf32> to vector<1x2x1xf32>
    %cst_16 = arith.constant dense<0.000000e+00> : vector<1xf32>
    %37 = vector.multi_reduction <add>, %36, %cst_16 [1, 2] : vector<1x2x1xf32> to vector<1xf32>
    %38 = vector.shape_cast %37 : vector<1xf32> to vector<1x1x1xf32>
    %39 = vector.extract %38[0, 0, 0] : f32 from vector<1x1x1xf32>
    %cst_17 = arith.constant 2.000000e+00 : f32
    %40 = arith.mulf %cst_17, %39 : f32
    %41 = vector.shape_cast %32 : vector<2x1xf32> to vector<1x2x1xf32>
    %cst_18 = arith.constant dense<0.000000e+00> : vector<1xf32>
    %42 = vector.multi_reduction <add>, %41, %cst_18 [1, 2] : vector<1x2x1xf32> to vector<1xf32>
    %43 = vector.shape_cast %42 : vector<1xf32> to vector<1x1x1xf32>
    %44 = vector.extract %43[0, 0, 0] : f32 from vector<1x1x1xf32>
    %cst_19 = arith.constant 2.000000e+00 : f32
    %45 = arith.mulf %cst_19, %44 : f32
    %46 = arith.addf %40, %45 : f32
    %47 = vector.shape_cast %35 : vector<2x1xf32> to vector<1x2x1xf32>
    %cst_20 = arith.constant dense<0.000000e+00> : vector<1xf32>
    %48 = vector.multi_reduction <add>, %47, %cst_20 [1, 2] : vector<1x2x1xf32> to vector<1xf32>
    %49 = vector.shape_cast %48 : vector<1xf32> to vector<1x1x1xf32>
    %50 = vector.extract %49[0, 0, 0] : f32 from vector<1x1x1xf32>
    %cst_21 = arith.constant 2.000000e+00 : f32
    %51 = arith.mulf %cst_21, %50 : f32
    %52 = arith.subf %46, %51 : f32
    %53 = vector.broadcast %52 : f32 to vector<1x1x128xf32>
    %c0_22 = arith.constant 0 : index
    %c0_23 = arith.constant 0 : index
    %c0_24 = arith.constant 0 : index
    %54 = vector.load %arg3[%c0_22, %c0_23, %c0_24] : memref<1x1x128xf32, #tpu.memory_space<vmem>>, vector<1x1x128xf32>
    tpu.vector_store %arg3[%c0_22, %c0_23, %c0_24], %53 {strides = array<i32>} : memref<1x1x128xf32, #tpu.memory_space<vmem>>, vector<1x1x128xf32>,
    return
  }
  func.func @transform_0(%arg0: i32) -> (i32, i32, i32) {
    %c0_i32 = arith.constant 0 : i32
    %c0_i32_0 = arith.constant 0 : i32
    %c0_i32_1 = arith.constant 0 : i32
    return %c0_i32, %arg0, %c0_i32_0 : i32, i32, i32
  }
  func.func @transform_1(%arg0: i32) -> (i32, i32, i32) {
    %c0_i32 = arith.constant 0 : i32
    %c0_i32_0 = arith.constant 0 : i32
    %c0_i32_1 = arith.constant 0 : i32
    return %c0_i32, %arg0, %c0_i32_0 : i32, i32, i32
  }
  func.func @transform_2(%arg0: i32) -> (i32, i32, i32) {
    %c0_i32 = arith.constant 0 : i32
    %c0_i32_0 = arith.constant 0 : i32
    %c0_i32_1 = arith.constant 0 : i32
    return %arg0, %c0_i32, %c0_i32_0 : i32, i32, i32
  }
}

</mosaic_0001>

<llo_original>
// kernel: tpu_custom_call.1
$region0: #{tpu_custom_call.1}
  #allocation0 [shape = 'u32[]', space=smem, size = 0x4, offset = 0x4, fixed_abs, tag = 'smem constant byte address 0x4 - core index']
  #allocation1 [shape = 'u32[144,128]{1,0:T(1,128)}', space=vmem, size = 0x12000, scoped, tag = 'internal scratch']
  %s0 = inlined_call_operand.hbm [shape: bf16[2,2,128], index: 0, kind: input, shape index: {}]
  %s1 = inlined_call_operand.vmem [shape: bf16[2,2,128], index: 1, kind: input, shape index: {}]
  %s2 = inlined_call_operand.hbm [shape: f32[1,1,128], index: 2, kind: output, shape index: {}]
  %s3 = sld [smem:[#allocation0]]
  $region22: #{tpu_custom_call.1} parent=0
    _
  %s5 = ssub.s32 1, %s3
  %s6 = scalar_select 0, %s5, %s3
  $region1: #{tpu_custom_call.1} parent=0
    #allocation2 [shape = 'u8[1024]{0}', space=vmem, size = 0x400, scoped, tag = 'input window, operand 0, single buffered']
    #allocation3 [shape = 's32[1]{0}', space=sflag, size = 0x4, scoped, tag = 'scoped memory for tpu_custom_call.1']
    #allocation4 [shape = 's32[1]{0}', space=sflag, size = 0x4, scoped, tag = 'scoped memory for tpu_custom_call.1']
    #allocation5 [shape = 'u8[512]{0}', space=vmem, size = 0x400, scoped, tag = 'output window, operand 0, single buffered']
    %7 = vsyncpa [#allocation3], 0
    %8 = vsyncpa [#allocation4], 0
    // Predicated region
    $region2: #{tpu_custom_call.1} parent=1 // pred_check
      _
    $region3: #{tpu_custom_call.1} parent=1 // pred_check_branch
      %10 = sbr.rel (0) target = $region5
    $region4: #{tpu_custom_call.1} parent=1 // pred_region
      %s12 = ssub.s32 32, 32
      %13 = vsyncadd [#allocation3], %s12
      %s14 = sshll.u32 [#allocation2], 4
      %s15 = int_to_ptr.vmem [resolvable:$true] %s14
      %20 = dma.hbm_to_vmem [thread:$0]  %s0, 32, %s15, [#allocation3], 16, 16, 1
    $region5: #{tpu_custom_call.1} parent=1 // pred_fallthru
      _
    // Predicated region
    $region6: #{tpu_custom_call.1} parent=1 // pred_check
      _
    $region7: #{tpu_custom_call.1} parent=1 // pred_check_branch
      %22 = sbr.rel (0) target = $region9
    $region8: #{tpu_custom_call.1} parent=1 // pred_region
      _
    $region9: #{tpu_custom_call.1} parent=1 // pred_fallthru
      _
    // Predicated region
    $region10: #{tpu_custom_call.1} parent=1 // pred_check
      _
    $region11: #{tpu_custom_call.1} parent=1 // pred_check_branch
      %24 = sbr.rel (0) target = $region13
    $region12: #{tpu_custom_call.1} parent=1 // pred_region
      %25 = dma.done [#allocation3], 32
    $region13: #{tpu_custom_call.1} parent=1 // pred_fallthru
      _
    %v26 = vld [vmem:[#allocation2] sm:$0x1]
    %v27 = vld [vmem:[#allocation2 + $0x1] sm:$0x1]
    %v28 = vunpack.c.l.bf16 %v26
    %v29 = vunpack.c.l.bf16 %v27
    %v30 = vld [vmem:[%s1] sm:$0x1]
    %v31 = vld [vmem:[%s1 + $0x1] sm:$0x1]
    %v32 = vunpack.c.l.bf16 %v30
    %v33 = vunpack.c.l.bf16 %v31
    %v34 = vmax.f32 %v28, 0.0
    %v35 = vmax.f32 %v29, 0.0
    %v36 = vand.u32 2147483647, %v28
    %v37 = vand.u32 2147483647, %v29
    %v38 = vsub.f32 0.0, %v36
    %v39 = vsub.f32 0.0, %v37
    %v40 = vmul.f32 %v38, 1.442695
    %v41 = vpow.pop %v40
    %v42 = vmul.f32 %v39, 1.442695
    %v43 = vpow.pop %v42
    %v44 = vadd.f32 %v41, 1.0
    %v45 = vlog2.pop %v44
    %v46 = vmul.f32 %v45, 0.6931472
    %v47 = vmul.f32 -0.5, %v41
    %v48 = vadd.f32 %v47, 1.0
    %v49 = vmul.f32 %v48, %v41
    %v50 = vand.u32 2147483647, %v41
    %vm51 = vcmp.lt.f32.partialorder %v50, 0.0004427343
    %v52 = vsel %vm51, %v49, %v46
    %v53 = vadd.f32 %v43, 1.0
    %v54 = vlog2.pop %v53
    %v55 = vmul.f32 %v54, 0.6931472
    %v56 = vmul.f32 -0.5, %v43
    %v57 = vadd.f32 %v56, 1.0
    %v58 = vmul.f32 %v57, %v43
    %v59 = vand.u32 2147483647, %v43
    %vm60 = vcmp.lt.f32.partialorder %v59, 0.0004427343
    %v61 = vsel %vm60, %v58, %v55
    %v62 = vadd.f32 %v34, %v52
    %v63 = vadd.f32 %v35, %v61
    %vm64 = vcmask 1041408
    %v65 = vsel %vm64, %v62, 0.0
    %v66 = vsel %vm64, %v63, 0.0
    %v67 = vadd.f32 %v65, %v66
    %v68 = vsel %vm64, %v32, 0.0
    %v69 = vsel %vm64, %v33, 0.0
    %v70 = vadd.f32 %v68, %v69
    %v71 = vadd.f32 %v67, %v70
    %v72 = vmul.f32 %v71, 0.25
    %v73 = vsub.f32 %v62, %v72
    %v74 = vsub.f32 %v63, %v72
    %v75 = vsub.f32 %v32, %v72
    %v76 = vsub.f32 %v33, %v72
    %v77 = vsel %vm64, %v73, 0.0
    %v78 = vsel %vm64, %v74, 0.0
    %v79 = vadd.f32 %v77, %v78
    %v80 = vsel %vm64, %v75, 0.0
    %v81 = vsel %vm64, %v76, 0.0
    %v82 = vadd.f32 %v80, %v81
    %v83 = vmul.f32 %v73, %v73
    %v84 = vmul.f32 %v74, %v74
    %v85 = vsel %vm64, %v83, 0.0
    %v86 = vsel %vm64, %v84, 0.0
    %v87 = vadd.f32 %v85, %v86
    %v88 = vsel %vm64, %v87, 0.0
    %89 = vadd.xlane.f32.xlu0 %v88
    %v90 = vpop.xlane.xlu0 %89
    %v91 = vmul.f32 %v75, %v75
    %v92 = vmul.f32 %v76, %v76
    %v93 = vsel %vm64, %v91, 0.0
    %v94 = vsel %vm64, %v92, 0.0
    %v95 = vadd.f32 %v93, %v94
    %v96 = vsel %vm64, %v95, 0.0
    %97 = vadd.xlane.f32.xlu0 %v96
    %v98 = vpop.xlane.xlu0 %97
    %v99 = vmul.f32 %v79, %v82
    %v100 = vsel %vm64, %v99, 0.0
    %101 = vadd.xlane.f32.xlu0 %v100
    %v102 = vpop.xlane.xlu0 %101
    %vm103 = vcmask 1024
    %v104 = vsel %vm103, %v90, 0.0
    %105 = vadd.xlane.f32.xlu0 %v104
    %v106 = vpop.xlane.xlu0 %105
    %v107 = vrot.slane %v106, 4
    %v108 = vadd.f32 %v106, %v107
    %v109 = vrot.slane %v108, 2
    %v110 = vadd.f32 %v108, %v109
    %v111 = vrot.slane %v110, 1
    %v112 = vadd.f32 %v110, %v111
    %s113 = vtos %v112
    %s114 = smul.f32 %s113, 2.0
    %v115 = vsel %vm103, %v98, 0.0
    %116 = vadd.xlane.f32.xlu0 %v115
    %v117 = vpop.xlane.xlu0 %116
    %v118 = vrot.slane %v117, 4
    %v119 = vadd.f32 %v117, %v118
    %v120 = vrot.slane %v119, 2
    %v121 = vadd.f32 %v119, %v120
    %v122 = vrot.slane %v121, 1
    %v123 = vadd.f32 %v121, %v122
    %s124 = vtos %v123
    %s125 = smul.f32 %s124, 2.0
    %s126 = sadd.f32 %s114, %s125
    %v127 = vsel %vm103, %v102, 0.0
    %128 = vadd.xlane.f32.xlu0 %v127
    %v129 = vpop.xlane.xlu0 %128
    %v130 = vrot.slane %v129, 4
    %v131 = vadd.f32 %v129, %v130
    %v132 = vrot.slane %v131, 2
    %v133 = vadd.f32 %v131, %v132
    %v134 = vrot.slane %v133, 1
    %v135 = vadd.f32 %v133, %v134
    %s136 = vtos %v135
    %s137 = smul.f32 %s136, 2.0
    %s138 = ssub.f32 %s126, %s137
    %v139 = vstv %s138
    %140 = vst [vmem:[#allocation5] sm:$0x1] %v139
    // Predicated region
    $region14: #{tpu_custom_call.1} parent=1 // pred_check
      _
    $region15: #{tpu_custom_call.1} parent=1 // pred_check_branch
      %142 = sbr.rel (0) target = $region17
    $region16: #{tpu_custom_call.1} parent=1 // pred_region
      %s144 = ssub.s32 16, 16
      %145 = vsyncadd [#allocation4], %s144
      %s147 = sshll.u32 [#allocation5], 4
      %s148 = int_to_ptr.vmem [resolvable:$true] %s147
      %150 = dma.vmem_to_hbm [thread:$0]  %s148, 16, %s2, [#allocation4]
    $region17: #{tpu_custom_call.1} parent=1 // pred_fallthru
      _
    // Predicated region
    $region18: #{tpu_custom_call.1} parent=1 // pred_check
      _
    $region19: #{tpu_custom_call.1} parent=1 // pred_check_branch
      %152 = sbr.rel (0) target = $region21
    $region20: #{tpu_custom_call.1} parent=1 // pred_region
      %153 = dma.done [#allocation4], 16
    $region21: #{tpu_custom_call.1} parent=1 // pred_fallthru
      _
    %154 = vsyncpa [#allocation3], 1
    %155 = vsyncpa [#allocation4], 1

</llo_original>
